<compile_context>
chip_gen: v7x
topology: tpu7x:2x2x1
jax: 0.10.0
libtpu: 0.0.40
codegen_flags: <defaults>
</compile_context>

<pallas_src>
import jax
import jax.numpy as jnp
from jax.experimental import pallas as pl
from jax.experimental.pallas import tpu as pltpu

IN_FEATURES = 13
HIDDEN = 8


def _round_up(n, m):
    return ((n + m - 1) // m) * m


def mlp_kernel(x_ref, w1t_ref, b1_ref, w2_ref, o_ref):
    # x_ref  : (TB, 13)  batch on sublanes, native layout (no wrapper transpose)
    # w1t_ref: (13, 8)   first-layer weight, (in, out) layout, VMEM-resident
    # b1_ref : (1, 8)    f32 bias (no in-kernel cast)
    # w2_ref : (1, 8)    f32 second-layer weight row (no in-kernel cast)
    # o_ref  : (TB, 1)
    h = jnp.dot(x_ref[...], w1t_ref[...],
                preferred_element_type=jnp.float32)          # (TB, 8)  MXU, f32 acc
    h = jnp.maximum(h + b1_ref[...], 0.0)                    # bias + ReLU (VPU)
    # Layer 2 (8 -> 1): VPU multiply + lane reduce (XLU); keeps the MXU out of a
    # degenerate N=1 matmul.
    o_ref[...] = jnp.sum(h * w2_ref[...], axis=-1, keepdims=True)  # (TB, 1)


def _choose_batch_tile(batch, itemsize):
    # Per-step x buffer = tb * 13 * itemsize; cap ≈ 3.4 MiB per buffer so the
    # double-buffered total (~8 MiB with output) fits the 16 MiB v5e scoped
    # default (32 MiB on v6e/v7x gives extra headroom for free).
    cap = 131072 if itemsize <= 2 else 65536
    b_pad_min = _round_up(max(batch, 1), 128)
    if b_pad_min <= 128:
        return 128
    # Keep at least 2 grid steps so both v7x TensorCores get work.
    half = _round_up(-(-b_pad_min // 2), 128)
    return min(cap, half)


def mlp_forward(x, w1, b1, w2, *, compute_dtype=jnp.bfloat16):
    """Forward of Linear(13,8) + ReLU + Linear(8,1,bias=False).

    x  : (B, 13) float32   (raw; fold any standardization into w1/b1 first)
    w1 : (8, 13) float32   (PyTorch (out, in) layout)
    b1 : (8,)    float32
    w2 : (1, 8)  float32   (PyTorch (out, in) layout)
    returns (B, 1) float32
    """
    B = x.shape[0]
    itemsize = jnp.dtype(compute_dtype).itemsize
    tb = _choose_batch_tile(B, itemsize)
    b_pad = _round_up(B, tb)

    xp = x if b_pad == B else jnp.pad(x, ((0, b_pad - B), (0, 0)))
    xp = xp.astype(compute_dtype)                                  # (Bpad, 13)

    w1t = w1.T.astype(compute_dtype)                               # (13, 8)
    b1r = b1.reshape(1, HIDDEN).astype(jnp.float32)                # (1, 8)
    w2r = w2.reshape(1, HIDDEN).astype(jnp.float32)                # (1, 8)

    cost = pl.CostEstimate(
        flops=224 * B,                         # 2*13*8 + 2*8 per sample
        transcendentals=0,
        bytes_accessed=B * IN_FEATURES * itemsize + B * 4
                       + (IN_FEATURES + 2) * HIDDEN * 4,
    )

    out = pl.pallas_call(
        mlp_kernel,
        out_shape=jax.ShapeDtypeStruct((b_pad, 1), jnp.float32),
        grid=(b_pad // tb,),
        in_specs=[
            pl.BlockSpec((tb, IN_FEATURES), lambda i: (i, 0)),   # x, batch-tiled
            pl.BlockSpec((IN_FEATURES, HIDDEN), lambda i: (0, 0)),  # VMEM-resident
            pl.BlockSpec((1, HIDDEN), lambda i: (0, 0)),
            pl.BlockSpec((1, HIDDEN), lambda i: (0, 0)),
        ],
        out_specs=pl.BlockSpec((tb, 1), lambda i: (i, 0)),
        compiler_params=pltpu.CompilerParams(
            dimension_semantics=("parallel",),                   # megacore / 2 TCs
        ),
        cost_estimate=cost,
    )(xp, w1t, b1r, w2r)

    return out[:B] if b_pad != B else out


def fold_standardization(w1, b1, mu, sigma):
    """Fold (x - mu) / sigma into the first Linear layer (exact, affine)."""
    w1f = w1 / sigma[None, :]          # (8, 13)
    b1f = b1 - w1f @ mu                # (8,)
    return w1f, b1f


def init_params(key):
    """nn.Linear-style U(-1/sqrt(fan_in), 1/sqrt(fan_in)) init, PyTorch layouts."""
    k1, k2, k3 = jax.random.split(key, 3)
    bound1 = 1.0 / jnp.sqrt(float(IN_FEATURES))
    bound2 = 1.0 / jnp.sqrt(float(HIDDEN))
    w1 = jax.random.uniform(k1, (HIDDEN, IN_FEATURES), jnp.float32, -bound1, bound1)
    b1 = jax.random.uniform(k2, (HIDDEN,), jnp.float32, -bound1, bound1)
    w2 = jax.random.uniform(k3, (1, HIDDEN), jnp.float32, -bound2, bound2)
    return w1, b1, w2


if __name__ == "__main__":
    key = jax.random.PRNGKey(0)
    kx, kp = jax.random.split(key)

    w1, b1, w2 = init_params(kp)

    def ref_fn(x_raw):
        mu = x_raw.mean(axis=0)
        sigma = x_raw.std(axis=0, ddof=1)     # torch.std default: unbiased
        xs = (x_raw - mu) / sigma
        h = jnp.maximum(xs @ w1.T + b1, 0.0)
        return h @ w2.T

    def run(x_raw, compute_dtype):
        mu = x_raw.mean(axis=0)
        sigma = x_raw.std(axis=0, ddof=1)
        w1f, b1f = fold_standardization(w1, b1, mu, sigma)
        return mlp_forward(x_raw, w1f, b1f, w2, compute_dtype=compute_dtype)

    # Small batch (single 128-wide tile).
    batch = 8
    x = jax.random.normal(kx, (batch, IN_FEATURES), jnp.float32)
    ref = ref_fn(x)

    out_f32 = jax.block_until_ready(run(x, jnp.float32))
    assert out_f32.shape == (batch, 1)
    assert jnp.allclose(out_f32, ref, atol=1e-4, rtol=1e-4), "f32 small-batch mismatch"

    out_bf16 = jax.block_until_ready(run(x, jnp.bfloat16))
    assert jnp.allclose(out_bf16, ref, atol=3e-2, rtol=3e-2), "bf16 small-batch mismatch"

    # Larger batch exercising the tiled grid (>= 2 parallel steps + padded tail).
    big_b = 2500
    xb = jax.random.normal(jax.random.PRNGKey(1), (big_b, IN_FEATURES), jnp.float32)
    ref_b = ref_fn(xb)

    out_b_f32 = jax.block_until_ready(run(xb, jnp.float32))
    assert out_b_f32.shape == (big_b, 1)
    assert jnp.allclose(out_b_f32, ref_b, atol=1e-4, rtol=1e-4), "f32 tiled mismatch"

    out_b_bf16 = jax.block_until_ready(run(xb, jnp.bfloat16))
    assert jnp.allclose(out_b_bf16, ref_b, atol=3e-2, rtol=3e-2), "bf16 tiled mismatch"

    print("KERNEL_OK")
</pallas_src>

<mosaic_0001>
module attributes {stable_mosaic.version = 11 : i64} {
  func.func @mlp_kernel(%arg0: i32, %arg1: memref<128x13xf32, #tpu.memory_space<vmem>>, %arg2: memref<13x8xf32, #tpu.memory_space<vmem>>, %arg3: memref<1x8xf32, #tpu.memory_space<vmem>>, %arg4: memref<1x8xf32, #tpu.memory_space<vmem>>, %arg5: memref<128x1xf32, #tpu.memory_space<vmem>>) attributes {dimension_semantics = [#tpu.dimension_semantics<parallel>], iteration_bounds = array<i64: 1>, scalar_prefetch = 0 : i64, scratch_operands = 0 : i64, tpu.core_type = #tpu.core_type<tc>, window_params = [{transform_indices = @transform_0, window_bounds = array<i64: 128, 13>}, {pipeline_mode = #tpu.pipeline_mode<synchronous>, transform_indices = @transform_1, window_bounds = array<i64: 13, 8>}, {pipeline_mode = #tpu.pipeline_mode<synchronous>, transform_indices = @transform_2, window_bounds = array<i64: 1, 8>}, {pipeline_mode = #tpu.pipeline_mode<synchronous>, transform_indices = @transform_3, window_bounds = array<i64: 1, 8>}, {transform_indices = @transform_4, window_bounds = array<i64: 128, 1>}]} {
    %c0 = arith.constant 0 : index
    %c0_0 = arith.constant 0 : index
    %0 = vector.load %arg1[%c0, %c0_0] : memref<128x13xf32, #tpu.memory_space<vmem>>, vector<128x13xf32>
    %c0_1 = arith.constant 0 : index
    %c0_2 = arith.constant 0 : index
    %1 = vector.load %arg2[%c0_1, %c0_2] : memref<13x8xf32, #tpu.memory_space<vmem>>, vector<13x8xf32>
    %cst = arith.constant dense<0.000000e+00> : vector<128x8xf32>
    %2 = tpu.matmul %0, %1, %cst {dimension_numbers = #tpu.dot_dimension_numbers<[1], [0], [0], [1], [0, 0, 1, 1], [], []>} : vector<128x13xf32>, vector<13x8xf32>, vector<128x8xf32> -> vector<128x8xf32>
    %c0_3 = arith.constant 0 : index
    %c0_4 = arith.constant 0 : index
    %3 = vector.load %arg3[%c0_3, %c0_4] : memref<1x8xf32, #tpu.memory_space<vmem>>, vector<1x8xf32>
    %4 = vector.broadcast %3 : vector<1x8xf32> to vector<128x8xf32>
    %5 = arith.addf %2, %4 : vector<128x8xf32>
    %cst_5 = arith.constant 0.000000e+00 : f32
    %6 = vector.broadcast %cst_5 : f32 to vector<128x8xf32>
    %7 = arith.maximumf %5, %6 : vector<128x8xf32>
    %c0_6 = arith.constant 0 : index
    %c0_7 = arith.constant 0 : index
    %8 = vector.load %arg4[%c0_6, %c0_7] : memref<1x8xf32, #tpu.memory_space<vmem>>, vector<1x8xf32>
    %9 = vector.broadcast %8 : vector<1x8xf32> to vector<128x8xf32>
    %10 = arith.mulf %7, %9 : vector<128x8xf32>
    %cst_8 = arith.constant dense<0.000000e+00> : vector<128xf32>
    %11 = vector.multi_reduction <add>, %10, %cst_8 [1] : vector<128x8xf32> to vector<128xf32>
    %12 = vector.shape_cast %11 : vector<128xf32> to vector<128x1xf32>
    %c0_9 = arith.constant 0 : index
    %c0_10 = arith.constant 0 : index
    %13 = vector.load %arg5[%c0_9, %c0_10] : memref<128x1xf32, #tpu.memory_space<vmem>>, vector<128x1xf32>
    tpu.vector_store %arg5[%c0_9, %c0_10], %12 {strides = array<i32>} : memref<128x1xf32, #tpu.memory_space<vmem>>, vector<128x1xf32>,
    return
  }
  func.func @transform_0(%arg0: i32) -> (i32, i32) {
    %c0_i32 = arith.constant 0 : i32
    %c0_i32_0 = arith.constant 0 : i32
    return %arg0, %c0_i32 : i32, i32
  }
  func.func @transform_1(%arg0: i32) -> (i32, i32) {
    %c0_i32 = arith.constant 0 : i32
    %c0_i32_0 = arith.constant 0 : i32
    %c0_i32_1 = arith.constant 0 : i32
    return %c0_i32, %c0_i32_0 : i32, i32
  }
  func.func @transform_2(%arg0: i32) -> (i32, i32) {
    %c0_i32 = arith.constant 0 : i32
    %c0_i32_0 = arith.constant 0 : i32
    %c0_i32_1 = arith.constant 0 : i32
    return %c0_i32, %c0_i32_0 : i32, i32
  }
  func.func @transform_3(%arg0: i32) -> (i32, i32) {
    %c0_i32 = arith.constant 0 : i32
    %c0_i32_0 = arith.constant 0 : i32
    %c0_i32_1 = arith.constant 0 : i32
    return %c0_i32, %c0_i32_0 : i32, i32
  }
  func.func @transform_4(%arg0: i32) -> (i32, i32) {
    %c0_i32 = arith.constant 0 : i32
    %c0_i32_0 = arith.constant 0 : i32
    return %arg0, %c0_i32 : i32, i32
  }
}

</mosaic_0001>

<llo_original>
// kernel: tpu_custom_call.1
$region0: #{tpu_custom_call.1}
  #allocation0 [shape = 'u32[]', space=smem, size = 0x4, offset = 0x4, fixed_abs, tag = 'smem constant byte address 0x4 - core index']
  #allocation1 [shape = 'u32[144,128]{1,0:T(1,128)}', space=vmem, size = 0x12000, scoped, tag = 'internal scratch']
  %s0 = inlined_call_operand.vmem [shape: f32[128,13], index: 0, kind: input, shape index: {}]
  %s1 = inlined_call_operand.vmem [shape: f32[13,8], index: 1, kind: input, shape index: {}]
  %s2 = inlined_call_operand.vmem [shape: f32[1,8], index: 2, kind: input, shape index: {}]
  %s3 = inlined_call_operand.vmem [shape: f32[1,8], index: 3, kind: input, shape index: {}]
  %s4 = inlined_call_operand.vmem [shape: f32[128,1], index: 4, kind: output, shape index: {}]
  %s5 = sld [smem:[#allocation0]]
  $region26: #{tpu_custom_call.1} parent=0
    _
  %s7 = ssub.s32 1, %s5
  %s8 = scalar_select 0, %s7, %s5
  // Predicated region
  $region2: #{tpu_custom_call.1} parent=0 // pred_check
    _
  $region3: #{tpu_custom_call.1} parent=0 // pred_check_branch
    %10 = sbr.rel (0) target = $region5
  $region4: #{tpu_custom_call.1} parent=0 // pred_region
    _
  $region5: #{tpu_custom_call.1} parent=0 // pred_fallthru
    _
  // Predicated region
  $region6: #{tpu_custom_call.1} parent=0 // pred_check
    _
  $region7: #{tpu_custom_call.1} parent=0 // pred_check_branch
    %12 = sbr.rel (0) target = $region9
  $region8: #{tpu_custom_call.1} parent=0 // pred_region
    _
  $region9: #{tpu_custom_call.1} parent=0 // pred_fallthru
    _
  // Predicated region
  $region10: #{tpu_custom_call.1} parent=0 // pred_check
    _
  $region11: #{tpu_custom_call.1} parent=0 // pred_check_branch
    %14 = sbr.rel (0) target = $region13
  $region12: #{tpu_custom_call.1} parent=0 // pred_region
    _
  $region13: #{tpu_custom_call.1} parent=0 // pred_fallthru
    _
  // Predicated region
  $region14: #{tpu_custom_call.1} parent=0 // pred_check
    _
  $region15: #{tpu_custom_call.1} parent=0 // pred_check_branch
    %16 = sbr.rel (0) target = $region17
  $region16: #{tpu_custom_call.1} parent=0 // pred_region
    _
  $region17: #{tpu_custom_call.1} parent=0 // pred_fallthru
    _
  %v17 = vld [vmem:[%s0] sm:$0xff]
  %v18 = vld [vmem:[%s0 + $0x8] sm:$0xff]
  %v19 = vld [vmem:[%s0 + $0x10] sm:$0xff]
  %v20 = vld [vmem:[%s0 + $0x18] sm:$0xff]
  %v21 = vld [vmem:[%s0 + $0x20] sm:$0xff]
  %v22 = vld [vmem:[%s0 + $0x28] sm:$0xff]
  %v23 = vld [vmem:[%s0 + $0x30] sm:$0xff]
  %v24 = vld [vmem:[%s0 + $0x38] sm:$0xff]
  %v25 = vld [vmem:[%s0 + $0x40] sm:$0xff]
  %v26 = vld [vmem:[%s0 + $0x48] sm:$0xff]
  %v27 = vld [vmem:[%s0 + $0x50] sm:$0xff]
  %v28 = vld [vmem:[%s0 + $0x58] sm:$0xff]
  %v29 = vld [vmem:[%s0 + $0x60] sm:$0xff]
  %v30 = vld [vmem:[%s0 + $0x68] sm:$0xff]
  %v31 = vld [vmem:[%s0 + $0x70] sm:$0xff]
  %v32 = vld [vmem:[%s0 + $0x78] sm:$0xff]
  %v33 = vld [vmem:[%s1] sm:$0xff]
  %v34 = vld [vmem:[%s1 + $0x8] sm:$0x1f]
  %v35 = vld [vmem:[%s2] sm:$0x1]
  %v37 = vlaneseq
  %v38 = vshrl.u32 %v37, 7
  %v39 = vsub.s32 0, %v38
  %v40 = vrot.slane %v35, %v39
  %vm42 = vcmask 105472
  %v44 = vsel %vm42, %v17, 0
  %v47 = vsel %vm42, %v18, 0
  %v50 = vsel %vm42, %v19, 0
  %v53 = vsel %vm42, %v20, 0
  %v56 = vsel %vm42, %v21, 0
  %v59 = vsel %vm42, %v22, 0
  %v62 = vsel %vm42, %v23, 0
  %v65 = vsel %vm42, %v24, 0
  %v68 = vsel %vm42, %v25, 0
  %v71 = vsel %vm42, %v26, 0
  %v74 = vsel %vm42, %v27, 0
  %v77 = vsel %vm42, %v28, 0
  %v80 = vsel %vm42, %v29, 0
  %v83 = vsel %vm42, %v30, 0
  %v86 = vsel %vm42, %v31, 0
  %v89 = vsel %vm42, %v32, 0
  %vm91 = vcmask 1044480
  %v93 = vsel %vm91, %v34, 0
  %95 = vmatprep.subr.mxu0 0.0
  %96 = vmatpush1.msra.mxu0 %v33
  %97 = vmatprep.subr.mxu0 0.0
  %98 = vmatpush1.msra.mxu0 %v93
  %99 = vmatprep.subr.mxu0 0.0
  %100 = vmatpush1.msra.mxu0 0.0
  %101 = vmatprep.subr.mxu0 0.0
  %102 = vmatpush1.msra.mxu0 0.0
  %103 = vmatprep.subr.mxu0 0.0
  %104 = vmatpush1.msra.mxu0 0.0
  %105 = vmatprep.subr.mxu0 0.0
  %106 = vmatpush1.msra.mxu0 0.0
  %107 = vmatprep.subr.mxu0 0.0
  %108 = vmatpush1.msra.mxu0 0.0
  %109 = vmatprep.subr.mxu0 0.0
  %110 = vmatpush1.msra.mxu0 0.0
  %111 = vmatprep.subr.mxu0 0.0
  %112 = vmatpush1.msra.mxu0 0.0
  %113 = vmatprep.subr.mxu0 0.0
  %114 = vmatpush1.msra.mxu0 0.0
  %115 = vmatprep.subr.mxu0 0.0
  %116 = vmatpush1.msra.mxu0 0.0
  %117 = vmatprep.subr.mxu0 0.0
  %118 = vmatpush1.msra.mxu0 0.0
  %119 = vmatprep.subr.mxu0 0.0
  %120 = vmatpush1.msra.mxu0 0.0
  %121 = vmatprep.subr.mxu0 0.0
  %122 = vmatpush1.msra.mxu0 0.0
  %123 = vmatprep.subr.mxu0 0.0
  %124 = vmatpush1.msra.mxu0 0.0
  %125 = vmatprep.subr.mxu0 0.0
  %126 = vmatpush1.msra.mxu0 0.0
  %127 = vmatprep.subr.mxu0 0.0
  %128 = vmatpush1.msra.mxu0 0.0
  %129 = vmatprep.subr.mxu0 0.0
  %130 = vmatpush1.msra.mxu0 0.0
  %131 = vmatprep.subr.mxu0 0.0
  %132 = vmatpush1.msra.mxu0 0.0
  %133 = vmatprep.subr.mxu0 0.0
  %134 = vmatpush1.msra.mxu0 0.0
  %135 = vmatprep.subr.mxu0 0.0
  %136 = vmatpush1.msra.mxu0 0.0
  %137 = vmatprep.subr.mxu0 0.0
  %138 = vmatpush1.msra.mxu0 0.0
  %139 = vmatprep.subr.mxu0 0.0
  %140 = vmatpush1.msra.mxu0 0.0
  %141 = vmatprep.subr.mxu0 0.0
  %142 = vmatpush1.msra.mxu0 0.0
  %143 = vmatprep.subr.mxu0 0.0
  %144 = vmatpush1.msra.mxu0 0.0
  %145 = vmatprep.subr.mxu0 0.0
  %146 = vmatpush1.msra.mxu0 0.0
  %147 = vmatprep.subr.mxu0 0.0
  %148 = vmatpush1.msra.mxu0 0.0
  %149 = vmatprep.subr.mxu0 0.0
  %150 = vmatpush1.msra.mxu0 0.0
  %151 = vmatprep.subr.mxu0 0.0
  %152 = vmatpush1.msra.mxu0 0.0
  %153 = vmatprep.subr.mxu0 0.0
  %154 = vmatpush1.msra.mxu0 0.0
  %155 = vmatprep.subr.mxu0 0.0
  %156 = vmatpush1.msra.mxu0 0.0
  %157 = vmatprep.subr.mxu0 0.0
  %158 = vmatpush1.msra.mxu0 0.0
  %159 = vmatprep.mubr.f32.mxu0 0.0
  %160 = vmatmul.mubr.f32.gmra.mrb[0].mxu0 %v44
  %v161 = vpop.f32.mrb[0].mxu0
  %v162 = vadd.f32 %v40, %v161
  %v163 = vpop.f32.mrb[0].mxu0
  %164 = vmatprep.mubr.f32.mxu0 0.0
  %165 = vmatmul.mubr.f32.gmra.mrb[0].mxu0 %v47
  %v166 = vpop.f32.mrb[0].mxu0
  %v167 = vadd.f32 %v40, %v166
  %v168 = vpop.f32.mrb[0].mxu0
  %169 = vmatprep.mubr.f32.mxu0 0.0
  %170 = vmatmul.mubr.f32.gmra.mrb[0].mxu0 %v50
  %v171 = vpop.f32.mrb[0].mxu0
  %v172 = vadd.f32 %v40, %v171
  %v173 = vpop.f32.mrb[0].mxu0
  %174 = vmatprep.mubr.f32.mxu0 0.0
  %175 = vmatmul.mubr.f32.gmra.mrb[0].mxu0 %v53
  %v176 = vpop.f32.mrb[0].mxu0
  %v177 = vadd.f32 %v40, %v176
  %v178 = vpop.f32.mrb[0].mxu0
  %179 = vmatprep.mubr.f32.mxu0 0.0
  %180 = vmatmul.mubr.f32.gmra.mrb[0].mxu0 %v56
  %v181 = vpop.f32.mrb[0].mxu0
  %v182 = vadd.f32 %v40, %v181
  %v183 = vpop.f32.mrb[0].mxu0
  %184 = vmatprep.mubr.f32.mxu0 0.0
  %185 = vmatmul.mubr.f32.gmra.mrb[0].mxu0 %v59
  %v186 = vpop.f32.mrb[0].mxu0
  %v187 = vadd.f32 %v40, %v186
  %v188 = vpop.f32.mrb[0].mxu0
  %189 = vmatprep.mubr.f32.mxu0 0.0
  %190 = vmatmul.mubr.f32.gmra.mrb[0].mxu0 %v62
  %v191 = vpop.f32.mrb[0].mxu0
  %v192 = vadd.f32 %v40, %v191
  %v193 = vpop.f32.mrb[0].mxu0
  %194 = vmatprep.mubr.f32.mxu0 0.0
  %195 = vmatmul.mubr.f32.gmra.mrb[0].mxu0 %v65
  %v196 = vpop.f32.mrb[0].mxu0
  %v197 = vadd.f32 %v40, %v196
  %v198 = vpop.f32.mrb[0].mxu0
  %199 = vmatprep.mubr.f32.mxu0 0.0
  %200 = vmatmul.mubr.f32.gmra.mrb[0].mxu0 %v68
  %v201 = vpop.f32.mrb[0].mxu0
  %v202 = vadd.f32 %v40, %v201
  %v203 = vpop.f32.mrb[0].mxu0
  %204 = vmatprep.mubr.f32.mxu0 0.0
  %205 = vmatmul.mubr.f32.gmra.mrb[0].mxu0 %v71
  %v206 = vpop.f32.mrb[0].mxu0
  %v207 = vadd.f32 %v40, %v206
  %v208 = vpop.f32.mrb[0].mxu0
  %209 = vmatprep.mubr.f32.mxu0 0.0
  %210 = vmatmul.mubr.f32.gmra.mrb[0].mxu0 %v74
  %v211 = vpop.f32.mrb[0].mxu0
  %v212 = vadd.f32 %v40, %v211
  %v213 = vpop.f32.mrb[0].mxu0
  %214 = vmatprep.mubr.f32.mxu0 0.0
  %215 = vmatmul.mubr.f32.gmra.mrb[0].mxu0 %v77
  %v216 = vpop.f32.mrb[0].mxu0
  %v217 = vadd.f32 %v40, %v216
  %v218 = vpop.f32.mrb[0].mxu0
  %219 = vmatprep.mubr.f32.mxu0 0.0
  %220 = vmatmul.mubr.f32.gmra.mrb[0].mxu0 %v80
  %v221 = vpop.f32.mrb[0].mxu0
  %v222 = vadd.f32 %v40, %v221
  %v223 = vpop.f32.mrb[0].mxu0
  %224 = vmatprep.mubr.f32.mxu0 0.0
  %225 = vmatmul.mubr.f32.gmra.mrb[0].mxu0 %v83
  %v226 = vpop.f32.mrb[0].mxu0
  %v227 = vadd.f32 %v40, %v226
  %v228 = vpop.f32.mrb[0].mxu0
  %229 = vmatprep.mubr.f32.mxu0 0.0
  %230 = vmatmul.mubr.f32.gmra.mrb[0].mxu0 %v86
  %v231 = vpop.f32.mrb[0].mxu0
  %v232 = vadd.f32 %v40, %v231
  %v233 = vpop.f32.mrb[0].mxu0
  %234 = vmatprep.mubr.f32.mxu0 0.0
  %235 = vmatmul.mubr.f32.gmra.mrb[0].mxu0 %v89
  %v236 = vpop.f32.mrb[0].mxu0
  %v237 = vadd.f32 %v40, %v236
  %v238 = vpop.f32.mrb[0].mxu0
  %239 = vdwg.mxu0
  %v240 = vmax.f32 %v162, 0.0
  %v241 = vmax.f32 %v167, 0.0
  %v242 = vmax.f32 %v172, 0.0
  %v243 = vmax.f32 %v177, 0.0
  %v244 = vmax.f32 %v182, 0.0
  %v245 = vmax.f32 %v187, 0.0
  %v246 = vmax.f32 %v192, 0.0
  %v247 = vmax.f32 %v197, 0.0
  %v248 = vmax.f32 %v202, 0.0
  %v249 = vmax.f32 %v207, 0.0
  %v250 = vmax.f32 %v212, 0.0
  %v251 = vmax.f32 %v217, 0.0
  %v252 = vmax.f32 %v222, 0.0
  %v253 = vmax.f32 %v227, 0.0
  %v254 = vmax.f32 %v232, 0.0
  %v255 = vmax.f32 %v237, 0.0
  %v256 = vld [vmem:[%s3] sm:$0x1]
  %v258 = vlaneseq
  %v259 = vshrl.u32 %v258, 7
  %v260 = vsub.s32 0, %v259
  %v261 = vrot.slane %v256, %v260
  %v263 = vmul.f32 %v240, %v261
  %v264 = vmul.f32 %v241, %v261
  %v265 = vmul.f32 %v242, %v261
  %v266 = vmul.f32 %v243, %v261
  %v267 = vmul.f32 %v244, %v261
  %v268 = vmul.f32 %v245, %v261
  %v269 = vmul.f32 %v246, %v261
  %v270 = vmul.f32 %v247, %v261
  %v271 = vmul.f32 %v248, %v261
  %v272 = vmul.f32 %v249, %v261
  %v273 = vmul.f32 %v250, %v261
  %v274 = vmul.f32 %v251, %v261
  %v275 = vmul.f32 %v252, %v261
  %v276 = vmul.f32 %v253, %v261
  %v277 = vmul.f32 %v254, %v261
  %v278 = vmul.f32 %v255, %v261
  %vm279 = vcmask 64512
  %v280 = vsel %vm279, %v263, 0.0
  %281 = vadd.xlane.f32.xlu0 %v280
  %v282 = vpop.xlane.xlu0 %281
  %v283 = vsel %vm279, %v264, 0.0
  %284 = vadd.xlane.f32.xlu0 %v283
  %v285 = vpop.xlane.xlu0 %284
  %v286 = vsel %vm279, %v265, 0.0
  %287 = vadd.xlane.f32.xlu0 %v286
  %v288 = vpop.xlane.xlu0 %287
  %v289 = vsel %vm279, %v266, 0.0
  %290 = vadd.xlane.f32.xlu0 %v289
  %v291 = vpop.xlane.xlu0 %290
  %v292 = vsel %vm279, %v267, 0.0
  %293 = vadd.xlane.f32.xlu0 %v292
  %v294 = vpop.xlane.xlu0 %293
  %v295 = vsel %vm279, %v268, 0.0
  %296 = vadd.xlane.f32.xlu0 %v295
  %v297 = vpop.xlane.xlu0 %296
  %v298 = vsel %vm279, %v269, 0.0
  %299 = vadd.xlane.f32.xlu0 %v298
  %v300 = vpop.xlane.xlu0 %299
  %v301 = vsel %vm279, %v270, 0.0
  %302 = vadd.xlane.f32.xlu0 %v301
  %v303 = vpop.xlane.xlu0 %302
  %v304 = vsel %vm279, %v271, 0.0
  %305 = vadd.xlane.f32.xlu0 %v304
  %v306 = vpop.xlane.xlu0 %305
  %v307 = vsel %vm279, %v272, 0.0
  %308 = vadd.xlane.f32.xlu0 %v307
  %v309 = vpop.xlane.xlu0 %308
  %v310 = vsel %vm279, %v273, 0.0
  %311 = vadd.xlane.f32.xlu0 %v310
  %v312 = vpop.xlane.xlu0 %311
  %v313 = vsel %vm279, %v274, 0.0
  %314 = vadd.xlane.f32.xlu0 %v313
  %v315 = vpop.xlane.xlu0 %314
  %v316 = vsel %vm279, %v275, 0.0
  %317 = vadd.xlane.f32.xlu0 %v316
  %v318 = vpop.xlane.xlu0 %317
  %v319 = vsel %vm279, %v276, 0.0
  %320 = vadd.xlane.f32.xlu0 %v319
  %v321 = vpop.xlane.xlu0 %320
  %v322 = vsel %vm279, %v277, 0.0
  %323 = vadd.xlane.f32.xlu0 %v322
  %v324 = vpop.xlane.xlu0 %323
  %v325 = vsel %vm279, %v278, 0.0
  %326 = vadd.xlane.f32.xlu0 %v325
  %v327 = vpop.xlane.xlu0 %326
  %vm328 = vcmask 7168
  %329 = vst.msk [vmem:[%s4] sm:$0xff] %vm328, %v282
  %330 = vst.msk [vmem:[%s4 + $0x8] sm:$0xff] %vm328, %v285
  %331 = vst.msk [vmem:[%s4 + $0x10] sm:$0xff] %vm328, %v288
  %332 = vst.msk [vmem:[%s4 + $0x18] sm:$0xff] %vm328, %v291
  %333 = vst.msk [vmem:[%s4 + $0x20] sm:$0xff] %vm328, %v294
  %334 = vst.msk [vmem:[%s4 + $0x28] sm:$0xff] %vm328, %v297
  %335 = vst.msk [vmem:[%s4 + $0x30] sm:$0xff] %vm328, %v300
  %336 = vst.msk [vmem:[%s4 + $0x38] sm:$0xff] %vm328, %v303
  %337 = vst.msk [vmem:[%s4 + $0x40] sm:$0xff] %vm328, %v306
  %338 = vst.msk [vmem:[%s4 + $0x48] sm:$0xff] %vm328, %v309
  %339 = vst.msk [vmem:[%s4 + $0x50] sm:$0xff] %vm328, %v312
  %340 = vst.msk [vmem:[%s4 + $0x58] sm:$0xff] %vm328, %v315
  %341 = vst.msk [vmem:[%s4 + $0x60] sm:$0xff] %vm328, %v318
  %342 = vst.msk [vmem:[%s4 + $0x68] sm:$0xff] %vm328, %v321
  %343 = vst.msk [vmem:[%s4 + $0x70] sm:$0xff] %vm328, %v324
  %344 = vst.msk [vmem:[%s4 + $0x78] sm:$0xff] %vm328, %v327
  // Predicated region
  $region18: #{tpu_custom_call.1} parent=0 // pred_check
    _
  $region19: #{tpu_custom_call.1} parent=0 // pred_check_branch
    %346 = sbr.rel (0) target = $region21
  $region20: #{tpu_custom_call.1} parent=0 // pred_region
    _
  $region21: #{tpu_custom_call.1} parent=0 // pred_fallthru
    _
  // Predicated region
  $region22: #{tpu_custom_call.1} parent=0 // pred_check
    _
  $region23: #{tpu_custom_call.1} parent=0 // pred_check_branch
    %348 = sbr.rel (0) target = $region25
  $region24: #{tpu_custom_call.1} parent=0 // pred_region
    _
  $region25: #{tpu_custom_call.1} parent=0 // pred_fallthru
    _

</llo_original>
